<compile_context>
chip_gen: v7x
topology: tpu7x:2x2x1
jax: 0.10.0
libtpu: 0.0.40
codegen_flags: <defaults>
</compile_context>

<pallas_src>
import functools
from typing import NamedTuple

import jax
import jax.numpy as jnp
from jax.experimental import pallas as pl
from jax.experimental.pallas import tpu as pltpu


def _round_up(x: int, m: int) -> int:
    return ((x + m - 1) // m) * m


def _default_vmem_limit_bytes() -> int:
    """Generation-aware scoped-VMEM limit: ~75% of physical, capped at 100 MiB."""
    try:
        cap = int(pltpu.get_tpu_info().vmem_capacity_bytes)
        return max(32 * 1024 * 1024, min((cap * 3) // 4, 100 * 1024 * 1024))
    except Exception:
        # Hardware query unavailable (e.g. interpret mode): conservative value
        # that fits every generation (v7x has 64 MiB physical per TC).
        return 48 * 1024 * 1024


@functools.lru_cache(maxsize=None)
def _build_call(M_pad, in_dim, h_pad, out_pad, tm, tn, h_chunk,
                x_dtype, compute_dtype, out_dtype, vmem_limit_bytes):
    x_dtype = jnp.dtype(x_dtype)
    compute_dtype = jnp.dtype(compute_dtype)
    out_dtype = jnp.dtype(out_dtype)

    def kernel(x_ref, w1_ref, b1_ref, w2_ref, b2_ref, o_ref, h_ref):
        # x_ref : (tm, in_dim) in the caller's dtype (cast in-kernel)
        # w1_ref: (in_dim, h_pad)  b1_ref: (1, h_pad) f32   [grid-invariant]
        # w2_ref: (h_pad, tn)      b2_ref: (1, tn)    f32   [pipelined per j]
        # o_ref : (tm, tn)         h_ref : (tm, h_pad) scratch, compute dtype
        j = pl.program_id(1)

        # fc1 + bias + tanh: once per row tile, reused across all output tiles.
        @pl.when(j == 0)
        def _():
            x = x_ref[...].astype(compute_dtype)
            # Chunk the hidden dim so the transient f32 activation stays small
            # (keeps it in-vreg instead of spilling; matters most on v5e).
            for c0 in range(0, h_pad, h_chunk):
                c1 = min(c0 + h_chunk, h_pad)
                h = jnp.dot(x, w1_ref[:, c0:c1],
                            preferred_element_type=jnp.float32)
                h = jnp.tanh(h + b1_ref[:, c0:c1])
                h_ref[:, c0:c1] = h.astype(h_ref.dtype)

        # fc2 for this (row tile, output tile) on the MXU, f32 accumulation.
        y = jnp.dot(h_ref[...], w2_ref[...],
                    preferred_element_type=jnp.float32) + b2_ref[...]
        o_ref[...] = y.astype(o_ref.dtype)

    n_row = M_pad // tm
    n_col = out_pad // tn

    csize = compute_dtype.itemsize
    flops = 2 * M_pad * (in_dim * h_pad + h_pad * out_pad)
    transcendentals = M_pad * h_pad
    bytes_accessed = (
        M_pad * in_dim * x_dtype.itemsize         # x
        + in_dim * h_pad * csize                  # w1 (fetched once)
        + h_pad * 4                               # b1
        + n_row * h_pad * out_pad * csize         # w2 (re-fetched per row tile)
        + n_row * out_pad * 4                     # b2
        + M_pad * out_pad * out_dtype.itemsize    # out
    )

    return pl.pallas_call(
        kernel,
        out_shape=jax.ShapeDtypeStruct((M_pad, out_pad), out_dtype),
        grid_spec=pltpu.PrefetchScalarGridSpec(
            num_scalar_prefetch=0,
            grid=(n_row, n_col),
            in_specs=[
                pl.BlockSpec((tm, in_dim), lambda i, j: (i, 0)),     # x row tile
                pl.BlockSpec((in_dim, h_pad), lambda i, j: (0, 0)),  # w1 (invariant)
                pl.BlockSpec((1, h_pad), lambda i, j: (0, 0)),       # b1 (invariant)
                pl.BlockSpec((h_pad, tn), lambda i, j: (0, j)),      # w2 tile
                pl.BlockSpec((1, tn), lambda i, j: (0, j)),          # b2 tile
            ],
            out_specs=pl.BlockSpec((tm, tn), lambda i, j: (i, j)),
            scratch_shapes=[pltpu.VMEM((tm, h_pad), compute_dtype)],
        ),
        compiler_params=pltpu.CompilerParams(
            # Row axis shards across v7x's 2 TensorCores; output-tile axis is
            # sequential so the fc1 scratch computed at j==0 is valid for j>0.
            dimension_semantics=("parallel", "arbitrary"),
            vmem_limit_bytes=vmem_limit_bytes,
        ),
        cost_estimate=pl.CostEstimate(
            flops=flops,
            transcendentals=transcendentals,
            bytes_accessed=bytes_accessed,
        ),
    )


class MLPParams(NamedTuple):
    w1: jax.Array            # (in_dim, h_pad) compute dtype
    b1: jax.Array            # (1, h_pad) f32
    w2: jax.Array            # (h_pad, out_pad) compute dtype
    b2: jax.Array            # (1, out_pad) f32
    in_dim: int
    h_pad: int
    out_dim: int
    out_pad: int
    tn: int
    compute_dtype: jnp.dtype


def prepare_mlp_params(w1, b1, w2, b2, *, compute_dtype=jnp.bfloat16, tn=512):
    """One-time parameter prep: cast to the compute dtype and pad to lane-dense
    (multiple-of-128) hidden / output dims so the per-call wrapper does no
    HBM passes over the weights."""
    in_dim, h_dim = w1.shape
    h2, out_dim = w2.shape
    assert h2 == h_dim and b1.shape == (h_dim,) and b2.shape == (out_dim,)

    compute_dtype = jnp.dtype(compute_dtype)
    h_pad = _round_up(h_dim, 128)
    # Output tile: multiple of 128 (256+ preferred for the 256-wide v6e/v7x MXU).
    tn_eff = max(128, min(_round_up(tn, 128), _round_up(out_dim, 128)))
    out_pad = _round_up(out_dim, tn_eff)

    w1c = w1.astype(compute_dtype)
    w2c = w2.astype(compute_dtype)
    b1r = b1.reshape(1, h_dim).astype(jnp.float32)
    b2r = b2.reshape(1, out_dim).astype(jnp.float32)
    if h_pad != h_dim:
        # Padded hidden units: w1 cols / b1 entries are 0 -> tanh(0)=0 -> the
        # zero-padded w2 rows contribute nothing.  Exact semantics preserved.
        w1c = jnp.pad(w1c, ((0, 0), (0, h_pad - h_dim)))
        b1r = jnp.pad(b1r, ((0, 0), (0, h_pad - h_dim)))
        w2c = jnp.pad(w2c, ((0, h_pad - h_dim), (0, 0)))
    if out_pad != out_dim:
        w2c = jnp.pad(w2c, ((0, 0), (0, out_pad - out_dim)))
        b2r = jnp.pad(b2r, ((0, 0), (0, out_pad - out_dim)))

    return MLPParams(w1=w1c, b1=b1r, w2=w2c, b2=b2r,
                     in_dim=in_dim, h_pad=h_pad,
                     out_dim=out_dim, out_pad=out_pad,
                     tn=tn_eff, compute_dtype=compute_dtype)


def mlp_forward(x, params: MLPParams, *, tm=256, h_chunk=512,
                out_dtype=None, vmem_limit_bytes=None):
    """Fused Linear -> Tanh -> Linear.  x: (..., in_dim) -> (..., out_dim)."""
    *lead, in_dim = x.shape
    assert in_dim == params.in_dim
    M = 1
    for d in lead:
        M *= d
    out_dtype = jnp.dtype(out_dtype) if out_dtype is not None else jnp.dtype(x.dtype)
    if vmem_limit_bytes is None:
        vmem_limit_bytes = _default_vmem_limit_bytes()

    # Row tile: multiple of 16 (bf16 sublane packing); shrink for tiny inputs.
    tm_eff = max(16, min(_round_up(tm, 16), _round_up(M, 16)))
    # Guarantee >= 2 row tiles for mid-sized M so the "parallel" row axis can
    # shard across v7x's two TensorCores (harmless on single-TC v5e/v6e).
    if M >= 64 and (M + tm_eff - 1) // tm_eff < 2:
        tm_eff = max(16, _round_up((M + 1) // 2, 16))
    M_pad = _round_up(M, tm_eff)

    h_chunk_eff = max(128, min(_round_up(h_chunk, 128), params.h_pad))

    # Keep x in its own dtype; the (cheap) cast happens inside the kernel.
    x2d = x.reshape(M, in_dim)
    if M_pad != M:
        x2d = jnp.pad(x2d, ((0, M_pad - M), (0, 0)))

    call = _build_call(M_pad, in_dim, params.h_pad, params.out_pad,
                       tm_eff, params.tn, h_chunk_eff,
                       jnp.dtype(x.dtype), params.compute_dtype, out_dtype,
                       int(vmem_limit_bytes))
    out2d = call(x2d, params.w1, params.b1, params.w2, params.b2)
    out2d = out2d[:M, :params.out_dim]
    return out2d.reshape(*lead, params.out_dim)


if __name__ == "__main__":
    # Small shapes consistent with MLP((in_dim, h_dim, out_d)) applied to a
    # (batch, in_dim) input (the CLIP-prefix projection use case).
    batch, in_dim, h_dim, out_d = 16, 64, 128, 64

    key = jax.random.PRNGKey(0)
    kx, k1, k2, k3, k4 = jax.random.split(key, 5)

    x = jax.random.normal(kx, (batch, in_dim), dtype=jnp.float32)

    # Parameters (same shapes as nn.Linear, stored transposed: (in, out)).
    w1 = jax.random.normal(k1, (in_dim, h_dim), dtype=jnp.float32) * 0.05
    b1 = jax.random.normal(k2, (h_dim,), dtype=jnp.float32) * 0.05
    w2 = jax.random.normal(k3, (h_dim, out_d), dtype=jnp.float32) * 0.05
    b2 = jax.random.normal(k4, (out_d,), dtype=jnp.float32) * 0.05

    # --- f32 compute path: parity with the PyTorch module ---
    p_f32 = prepare_mlp_params(w1, b1, w2, b2, compute_dtype=jnp.float32)
    out_f32 = jax.block_until_ready(mlp_forward(x, p_f32))
    ref_f32 = jnp.tanh(x @ w1 + b1) @ w2 + b2
    assert out_f32.shape == (batch, out_d)
    assert jnp.allclose(out_f32, ref_f32, atol=1e-3, rtol=1e-3)

    # --- default fast path: bf16 MXU operands, f32 accumulation ---
    p_bf16 = prepare_mlp_params(w1, b1, w2, b2)  # compute_dtype=bfloat16
    out_bf16 = jax.block_until_ready(mlp_forward(x, p_bf16))
    xb, w1b, w2b = (a.astype(jnp.bfloat16) for a in (x, w1, w2))
    ref_h = jnp.tanh(jnp.dot(xb, w1b, preferred_element_type=jnp.float32) + b1)
    ref_bf16 = jnp.dot(ref_h.astype(jnp.bfloat16), w2b,
                       preferred_element_type=jnp.float32) + b2
    assert out_bf16.shape == (batch, out_d)
    assert jnp.allclose(out_bf16, ref_bf16, atol=5e-3, rtol=5e-3)
    assert jnp.allclose(out_bf16, ref_f32, atol=5e-2, rtol=5e-2)

    print("KERNEL_OK")
</pallas_src>

<mosaic_0001>
module attributes {stable_mosaic.version = 11 : i64} {
  func.func @kernel(%arg0: i32, %arg1: i32, %arg2: memref<16x64xf32, #tpu.memory_space<vmem>>, %arg3: memref<64x128xf32, #tpu.memory_space<vmem>>, %arg4: memref<1x128xf32, #tpu.memory_space<vmem>>, %arg5: memref<128x128xf32, #tpu.memory_space<vmem>>, %arg6: memref<1x128xf32, #tpu.memory_space<vmem>>, %arg7: memref<16x128xf32, #tpu.memory_space<vmem>>, %arg8: memref<16x128xf32, #tpu.memory_space<vmem>>) attributes {dimension_semantics = [#tpu.dimension_semantics<parallel>, #tpu.dimension_semantics<arbitrary>], iteration_bounds = array<i64: 1, 1>, scalar_prefetch = 0 : i64, scratch_operands = 1 : i64, tpu.core_type = #tpu.core_type<tc>, window_params = [{transform_indices = @transform_0, window_bounds = array<i64: 16, 64>}, {pipeline_mode = #tpu.pipeline_mode<synchronous>, transform_indices = @transform_1, window_bounds = array<i64: 64, 128>}, {pipeline_mode = #tpu.pipeline_mode<synchronous>, transform_indices = @transform_2, window_bounds = array<i64: 1, 128>}, {transform_indices = @transform_3, window_bounds = array<i64: 128, 128>}, {transform_indices = @transform_4, window_bounds = array<i64: 1, 128>}, {transform_indices = @transform_5, window_bounds = array<i64: 16, 128>}]} {
    %c0_i32 = arith.constant 0 : i32
    %0 = arith.cmpi eq, %arg1, %c0_i32 : i32
    %1 = arith.extui %0 : i1 to i32
    %c0_i32_0 = arith.constant 0 : i32
    %2 = arith.cmpi ne, %1, %c0_i32_0 : i32
    scf.if %2 {
      %c0_8 = arith.constant 0 : index
      %c0_9 = arith.constant 0 : index
      %10 = vector.load %arg2[%c0_8, %c0_9] : memref<16x64xf32, #tpu.memory_space<vmem>>, vector<16x64xf32>
      %c0_10 = arith.constant 0 : index
      %c0_11 = arith.constant 0 : index
      %11 = vector.load %arg3[%c0_10, %c0_11] : memref<64x128xf32, #tpu.memory_space<vmem>>, vector<64x128xf32>
      %cst_12 = arith.constant dense<0.000000e+00> : vector<16x128xf32>
      %12 = tpu.matmul %10, %11, %cst_12 {dimension_numbers = #tpu.dot_dimension_numbers<[1], [0], [0], [1], [0, 0, 1, 1], [], []>} : vector<16x64xf32>, vector<64x128xf32>, vector<16x128xf32> -> vector<16x128xf32>
      %c0_13 = arith.constant 0 : index
      %c0_14 = arith.constant 0 : index
      %13 = vector.load %arg4[%c0_13, %c0_14] : memref<1x128xf32, #tpu.memory_space<vmem>>, vector<1x128xf32>
      %14 = vector.broadcast %13 : vector<1x128xf32> to vector<16x128xf32>
      %15 = arith.addf %12, %14 : vector<16x128xf32>
      %16 = math.tanh %15 : vector<16x128xf32>
      %c0_15 = arith.constant 0 : index
      %c0_16 = arith.constant 0 : index
      %17 = vector.load %arg8[%c0_15, %c0_16] : memref<16x128xf32, #tpu.memory_space<vmem>>, vector<16x128xf32>
      tpu.vector_store %arg8[%c0_15, %c0_16], %16 {strides = array<i32>} : memref<16x128xf32, #tpu.memory_space<vmem>>, vector<16x128xf32>,
    } else {
    }
    %c0 = arith.constant 0 : index
    %c0_1 = arith.constant 0 : index
    %3 = vector.load %arg8[%c0, %c0_1] : memref<16x128xf32, #tpu.memory_space<vmem>>, vector<16x128xf32>
    %c0_2 = arith.constant 0 : index
    %c0_3 = arith.constant 0 : index
    %4 = vector.load %arg5[%c0_2, %c0_3] : memref<128x128xf32, #tpu.memory_space<vmem>>, vector<128x128xf32>
    %cst = arith.constant dense<0.000000e+00> : vector<16x128xf32>
    %5 = tpu.matmul %3, %4, %cst {dimension_numbers = #tpu.dot_dimension_numbers<[1], [0], [0], [1], [0, 0, 1, 1], [], []>} : vector<16x128xf32>, vector<128x128xf32>, vector<16x128xf32> -> vector<16x128xf32>
    %c0_4 = arith.constant 0 : index
    %c0_5 = arith.constant 0 : index
    %6 = vector.load %arg6[%c0_4, %c0_5] : memref<1x128xf32, #tpu.memory_space<vmem>>, vector<1x128xf32>
    %7 = vector.broadcast %6 : vector<1x128xf32> to vector<16x128xf32>
    %8 = arith.addf %5, %7 : vector<16x128xf32>
    %c0_6 = arith.constant 0 : index
    %c0_7 = arith.constant 0 : index
    %9 = vector.load %arg7[%c0_6, %c0_7] : memref<16x128xf32, #tpu.memory_space<vmem>>, vector<16x128xf32>
    tpu.vector_store %arg7[%c0_6, %c0_7], %8 {strides = array<i32>} : memref<16x128xf32, #tpu.memory_space<vmem>>, vector<16x128xf32>,
    return
  }
  func.func @transform_0(%arg0: i32, %arg1: i32) -> (i32, i32) {
    %c0_i32 = arith.constant 0 : i32
    %c0_i32_0 = arith.constant 0 : i32
    return %arg0, %c0_i32 : i32, i32
  }
  func.func @transform_1(%arg0: i32, %arg1: i32) -> (i32, i32) {
    %c0_i32 = arith.constant 0 : i32
    %c0_i32_0 = arith.constant 0 : i32
    %c0_i32_1 = arith.constant 0 : i32
    return %c0_i32, %c0_i32_0 : i32, i32
  }
  func.func @transform_2(%arg0: i32, %arg1: i32) -> (i32, i32) {
    %c0_i32 = arith.constant 0 : i32
    %c0_i32_0 = arith.constant 0 : i32
    %c0_i32_1 = arith.constant 0 : i32
    return %c0_i32, %c0_i32_0 : i32, i32
  }
  func.func @transform_3(%arg0: i32, %arg1: i32) -> (i32, i32) {
    %c0_i32 = arith.constant 0 : i32
    %c0_i32_0 = arith.constant 0 : i32
    return %c0_i32, %arg1 : i32, i32
  }
  func.func @transform_4(%arg0: i32, %arg1: i32) -> (i32, i32) {
    %c0_i32 = arith.constant 0 : i32
    %c0_i32_0 = arith.constant 0 : i32
    return %c0_i32, %arg1 : i32, i32
  }
  func.func @transform_5(%arg0: i32, %arg1: i32) -> (i32, i32) {
    %c0_i32 = arith.constant 0 : i32
    return %arg0, %arg1 : i32, i32
  }
}

</mosaic_0001>

<llo_original>
// kernel: tpu_custom_call.1
$region0: #{tpu_custom_call.1}
  #allocation0 [shape = 'u32[]', space=smem, size = 0x4, offset = 0x4, fixed_abs, tag = 'smem constant byte address 0x4 - core index']
  #allocation1 [shape = 'u32[144,128]{1,0:T(1,128)}', space=vmem, size = 0x12000, scoped, tag = 'internal scratch']
  #allocation2 [shape = 'f32[16,128]{1,0:T(8,128)}', space=vmem, size = 0x2000, scoped, tag = 'scratch operand']
  %s0 = inlined_call_operand.hbm [shape: f32[16,64], index: 0, kind: input, shape index: {}]
  %s1 = inlined_call_operand.hbm [shape: f32[64,128], index: 1, kind: input, shape index: {}]
  %s2 = inlined_call_operand.vmem [shape: f32[1,128], index: 2, kind: input, shape index: {}]
  %s3 = inlined_call_operand.hbm [shape: f32[128,128], index: 3, kind: input, shape index: {}]
  %s4 = inlined_call_operand.vmem [shape: f32[1,128], index: 4, kind: input, shape index: {}]
  %s5 = inlined_call_operand.hbm [shape: f32[16,128], index: 5, kind: output, shape index: {}]
  %s6 = sld [smem:[#allocation0]]
  $region46: #{tpu_custom_call.1} parent=0
    _
  %s8 = ssub.s32 1, %s6
  %s9 = scalar_select 0, %s8, %s6
  $region1: #{tpu_custom_call.1} parent=0
    #allocation3 [shape = 'u8[8192]{0}', space=vmem, size = 0x2000, scoped, tag = 'input window, operand 0, single buffered']
    #allocation4 [shape = 's32[1]{0}', space=sflag, size = 0x4, scoped, tag = 'scoped memory for tpu_custom_call.1']
    #allocation5 [shape = 's32[1]{0}', space=sflag, size = 0x4, scoped, tag = 'scoped memory for tpu_custom_call.1']
    #allocation6 [shape = 'u8[32768]{0}', space=vmem, size = 0x8000, scoped, tag = 'input window, operand 1, single buffered']
    #allocation7 [shape = 's32[1]{0}', space=sflag, size = 0x4, scoped, tag = 'scoped memory for tpu_custom_call.1']
    #allocation8 [shape = 'u8[65536]{0}', space=vmem, size = 0x10000, scoped, tag = 'input window, operand 3, single buffered']
    #allocation9 [shape = 'u8[8192]{0}', space=vmem, size = 0x2000, scoped, tag = 'output window, operand 0, single buffered']
    %10 = vsyncpa [#allocation4], 0
    %11 = vsyncpa [#allocation7], 0
    %12 = vsyncpa [#allocation5], 0
    // Predicated region
    $region2: #{tpu_custom_call.1} parent=1 // pred_check
      _
    $region3: #{tpu_custom_call.1} parent=1 // pred_check_branch
      %14 = sbr.rel (0) target = $region5
    $region4: #{tpu_custom_call.1} parent=1 // pred_region
      %s16 = ssub.s32 256, 256
      %17 = vsyncadd [#allocation4], %s16
      %s18 = sshll.u32 [#allocation3], 4
      %s19 = int_to_ptr.vmem [resolvable:$true] %s18
      %24 = dma.hbm_to_vmem [thread:$0]  %s0, 256, %s19, [#allocation4], 128, 128, 8
    $region5: #{tpu_custom_call.1} parent=1 // pred_fallthru
      _
    // Predicated region
    $region6: #{tpu_custom_call.1} parent=1 // pred_check
      _
    $region7: #{tpu_custom_call.1} parent=1 // pred_check_branch
      %26 = sbr.rel (0) target = $region9
    $region8: #{tpu_custom_call.1} parent=1 // pred_region
      %s28 = ssub.s32 1024, 1024
      %29 = vsyncadd [#allocation7], %s28
      %s30 = sshll.u32 [#allocation6], 4
      %s31 = int_to_ptr.vmem [resolvable:$true] %s30
      %36 = dma.hbm_to_vmem [thread:$0]  %s1, 1024, %s31, [#allocation7], 128, 128, 8
    $region9: #{tpu_custom_call.1} parent=1 // pred_fallthru
      _
    // Predicated region
    $region10: #{tpu_custom_call.1} parent=1 // pred_check
      _
    $region11: #{tpu_custom_call.1} parent=1 // pred_check_branch
      %38 = sbr.rel (0) target = $region13
    $region12: #{tpu_custom_call.1} parent=1 // pred_region
      _
    $region13: #{tpu_custom_call.1} parent=1 // pred_fallthru
      _
    // Predicated region
    $region14: #{tpu_custom_call.1} parent=1 // pred_check
      _
    $region15: #{tpu_custom_call.1} parent=1 // pred_check_branch
      %40 = sbr.rel (0) target = $region17
    $region16: #{tpu_custom_call.1} parent=1 // pred_region
      %s42 = ssub.s32 2048, 2048
      %43 = vsyncadd [#allocation7], %s42
      %s44 = sshll.u32 [#allocation8], 4
      %s45 = int_to_ptr.vmem [resolvable:$true] %s44
      %50 = dma.hbm_to_vmem [thread:$0]  %s3, 2048, %s45, [#allocation7], 128, 128, 8
    $region17: #{tpu_custom_call.1} parent=1 // pred_fallthru
      _
    // Predicated region
    $region18: #{tpu_custom_call.1} parent=1 // pred_check
      _
    $region19: #{tpu_custom_call.1} parent=1 // pred_check_branch
      %52 = sbr.rel (0) target = $region21
    $region20: #{tpu_custom_call.1} parent=1 // pred_region
      _
    $region21: #{tpu_custom_call.1} parent=1 // pred_fallthru
      _
    // Predicated region
    $region22: #{tpu_custom_call.1} parent=1 // pred_check
      _
    $region23: #{tpu_custom_call.1} parent=1 // pred_check_branch
      %54 = sbr.rel (0) target = $region25
    $region24: #{tpu_custom_call.1} parent=1 // pred_region
      %55 = dma.done [#allocation4], 256
    $region25: #{tpu_custom_call.1} parent=1 // pred_fallthru
      _
    // Predicated region
    $region26: #{tpu_custom_call.1} parent=1 // pred_check
      _
    $region27: #{tpu_custom_call.1} parent=1 // pred_check_branch
      %57 = sbr.rel (0) target = $region29
    $region28: #{tpu_custom_call.1} parent=1 // pred_region
      %58 = dma.done [#allocation7], 1024
    $region29: #{tpu_custom_call.1} parent=1 // pred_fallthru
      _
    // Predicated region
    $region30: #{tpu_custom_call.1} parent=1 // pred_check
      _
    $region31: #{tpu_custom_call.1} parent=1 // pred_check_branch
      %60 = sbr.rel (0) target = $region33
    $region32: #{tpu_custom_call.1} parent=1 // pred_region
      %61 = dma.done [#allocation7], 2048
    $region33: #{tpu_custom_call.1} parent=1 // pred_fallthru
      _
    %p62 = scmp.eq.s32.totalorder 0, 0
    // Predicated region
    $region34: #{tpu_custom_call.1} parent=1 // pred_check
      %p63 = pneg %p62
    $region35: #{tpu_custom_call.1} parent=1 // pred_check_branch
      %65 = sbr.rel (%p63) target = $region37
    $region36: #{tpu_custom_call.1} parent=1 // pred_region
      %v66 = vld [vmem:[#allocation3] sm:$0xff]
      %v67 = vld [vmem:[#allocation3 + $0x8] sm:$0xff]
      %v68 = vld [vmem:[#allocation6] sm:$0xff]
      %v69 = vld [vmem:[#allocation6 + $0x8] sm:$0xff]
      %v70 = vld [vmem:[#allocation6 + $0x10] sm:$0xff]
      %v71 = vld [vmem:[#allocation6 + $0x18] sm:$0xff]
      %v72 = vld [vmem:[#allocation6 + $0x20] sm:$0xff]
      %v73 = vld [vmem:[#allocation6 + $0x28] sm:$0xff]
      %v74 = vld [vmem:[#allocation6 + $0x30] sm:$0xff]
      %v75 = vld [vmem:[#allocation6 + $0x38] sm:$0xff]
      %v76 = vld [vmem:[%s2] sm:$0x1]
      %v78 = vlaneseq
      %v79 = vshrl.u32 %v78, 7
      %v80 = vsub.s32 0, %v79
      %v81 = vrot.slane %v76, %v80
      %vm83 = vcmask 523264
      %v85 = vsel %vm83, %v66, 0
      %v88 = vsel %vm83, %v67, 0
      %90 = vmatprep.subr.mxu0 0.0
      %91 = vmatpush1.msra.mxu0 %v68
      %92 = vmatprep.subr.mxu0 0.0
      %93 = vmatpush1.msra.mxu0 %v69
      %94 = vmatprep.subr.mxu0 0.0
      %95 = vmatpush1.msra.mxu0 %v70
      %96 = vmatprep.subr.mxu0 0.0
      %97 = vmatpush1.msra.mxu0 %v71
      %98 = vmatprep.subr.mxu0 0.0
      %99 = vmatpush1.msra.mxu0 %v72
      %100 = vmatprep.subr.mxu0 0.0
      %101 = vmatpush1.msra.mxu0 %v73
      %102 = vmatprep.subr.mxu0 0.0
      %103 = vmatpush1.msra.mxu0 %v74
      %104 = vmatprep.subr.mxu0 0.0
      %105 = vmatpush1.msra.mxu0 %v75
      %106 = vmatprep.subr.mxu0 0.0
      %107 = vmatpush1.msra.mxu0 0.0
      %108 = vmatprep.subr.mxu0 0.0
      %109 = vmatpush1.msra.mxu0 0.0
      %110 = vmatprep.subr.mxu0 0.0
      %111 = vmatpush1.msra.mxu0 0.0
      %112 = vmatprep.subr.mxu0 0.0
      %113 = vmatpush1.msra.mxu0 0.0
      %114 = vmatprep.subr.mxu0 0.0
      %115 = vmatpush1.msra.mxu0 0.0
      %116 = vmatprep.subr.mxu0 0.0
      %117 = vmatpush1.msra.mxu0 0.0
      %118 = vmatprep.subr.mxu0 0.0
      %119 = vmatpush1.msra.mxu0 0.0
      %120 = vmatprep.subr.mxu0 0.0
      %121 = vmatpush1.msra.mxu0 0.0
      %122 = vmatprep.subr.mxu0 0.0
      %123 = vmatpush1.msra.mxu0 0.0
      %124 = vmatprep.subr.mxu0 0.0
      %125 = vmatpush1.msra.mxu0 0.0
      %126 = vmatprep.subr.mxu0 0.0
      %127 = vmatpush1.msra.mxu0 0.0
      %128 = vmatprep.subr.mxu0 0.0
      %129 = vmatpush1.msra.mxu0 0.0
      %130 = vmatprep.subr.mxu0 0.0
      %131 = vmatpush1.msra.mxu0 0.0
      %132 = vmatprep.subr.mxu0 0.0
      %133 = vmatpush1.msra.mxu0 0.0
      %134 = vmatprep.subr.mxu0 0.0
      %135 = vmatpush1.msra.mxu0 0.0
      %136 = vmatprep.subr.mxu0 0.0
      %137 = vmatpush1.msra.mxu0 0.0
      %138 = vmatprep.subr.mxu0 0.0
      %139 = vmatpush1.msra.mxu0 0.0
      %140 = vmatprep.subr.mxu0 0.0
      %141 = vmatpush1.msra.mxu0 0.0
      %142 = vmatprep.subr.mxu0 0.0
      %143 = vmatpush1.msra.mxu0 0.0
      %144 = vmatprep.subr.mxu0 0.0
      %145 = vmatpush1.msra.mxu0 0.0
      %146 = vmatprep.subr.mxu0 0.0
      %147 = vmatpush1.msra.mxu0 0.0
      %148 = vmatprep.subr.mxu0 0.0
      %149 = vmatpush1.msra.mxu0 0.0
      %150 = vmatprep.subr.mxu0 0.0
      %151 = vmatpush1.msra.mxu0 0.0
      %152 = vmatprep.subr.mxu0 0.0
      %153 = vmatpush1.msra.mxu0 0.0
      %154 = vmatprep.mubr.f32.mxu0 0.0
      %155 = vmatmul.mubr.f32.gmra.mrb[0].mxu0 %v85
      %v156 = vpop.f32.mrb[0].mxu0
      %v157 = vadd.f32 %v81, %v156
      %v158 = vpop.f32.mrb[0].mxu0
      %159 = vmatprep.mubr.f32.mxu0 0.0
      %160 = vmatmul.mubr.f32.gmra.mrb[0].mxu0 %v88
      %v161 = vpop.f32.mrb[0].mxu0
      %v162 = vadd.f32 %v81, %v161
      %v163 = vpop.f32.mrb[0].mxu0
      %164 = vdwg.mxu0
      %v165 = vtanh.pop %v157
      %v166 = vtanh.pop %v162
      %167 = vst [vmem:[#allocation2] sm:$0xff] %v165
      %168 = vst [vmem:[#allocation2 + $0x8] sm:$0xff] %v166
    $region37: #{tpu_custom_call.1} parent=1 // pred_fallthru
      _
    %v169 = vld [vmem:[#allocation2] sm:$0xff]
    %v170 = vld [vmem:[#allocation2 + $0x8] sm:$0xff]
    %v171 = vld [vmem:[#allocation8] sm:$0xff]
    %v172 = vld [vmem:[#allocation8 + $0x8] sm:$0xff]
    %v173 = vld [vmem:[#allocation8 + $0x10] sm:$0xff]
    %v174 = vld [vmem:[#allocation8 + $0x18] sm:$0xff]
    %v175 = vld [vmem:[#allocation8 + $0x20] sm:$0xff]
    %v176 = vld [vmem:[#allocation8 + $0x28] sm:$0xff]
    %v177 = vld [vmem:[#allocation8 + $0x30] sm:$0xff]
    %v178 = vld [vmem:[#allocation8 + $0x38] sm:$0xff]
    %v179 = vld [vmem:[#allocation8 + $0x40] sm:$0xff]
    %v180 = vld [vmem:[#allocation8 + $0x48] sm:$0xff]
    %v181 = vld [vmem:[#allocation8 + $0x50] sm:$0xff]
    %v182 = vld [vmem:[#allocation8 + $0x58] sm:$0xff]
    %v183 = vld [vmem:[#allocation8 + $0x60] sm:$0xff]
    %v184 = vld [vmem:[#allocation8 + $0x68] sm:$0xff]
    %v185 = vld [vmem:[#allocation8 + $0x70] sm:$0xff]
    %v186 = vld [vmem:[#allocation8 + $0x78] sm:$0xff]
    %v187 = vld [vmem:[%s4] sm:$0x1]
    %v189 = vlaneseq
    %v190 = vshrl.u32 %v189, 7
    %v191 = vsub.s32 0, %v190
    %v192 = vrot.slane %v187, %v191
    %194 = vmatprep.subr.mxu0 0.0
    %195 = vmatpush1.msra.mxu0 %v171
    %196 = vmatprep.subr.mxu0 0.0
    %197 = vmatpush1.msra.mxu0 %v172
    %198 = vmatprep.subr.mxu0 0.0
    %199 = vmatpush1.msra.mxu0 %v173
    %200 = vmatprep.subr.mxu0 0.0
    %201 = vmatpush1.msra.mxu0 %v174
    %202 = vmatprep.subr.mxu0 0.0
    %203 = vmatpush1.msra.mxu0 %v175
    %204 = vmatprep.subr.mxu0 0.0
    %205 = vmatpush1.msra.mxu0 %v176
    %206 = vmatprep.subr.mxu0 0.0
    %207 = vmatpush1.msra.mxu0 %v177
    %208 = vmatprep.subr.mxu0 0.0
    %209 = vmatpush1.msra.mxu0 %v178
    %210 = vmatprep.subr.mxu0 0.0
    %211 = vmatpush1.msra.mxu0 %v179
    %212 = vmatprep.subr.mxu0 0.0
    %213 = vmatpush1.msra.mxu0 %v180
    %214 = vmatprep.subr.mxu0 0.0
    %215 = vmatpush1.msra.mxu0 %v181
    %216 = vmatprep.subr.mxu0 0.0
    %217 = vmatpush1.msra.mxu0 %v182
    %218 = vmatprep.subr.mxu0 0.0
    %219 = vmatpush1.msra.mxu0 %v183
    %220 = vmatprep.subr.mxu0 0.0
    %221 = vmatpush1.msra.mxu0 %v184
    %222 = vmatprep.subr.mxu0 0.0
    %223 = vmatpush1.msra.mxu0 %v185
    %224 = vmatprep.subr.mxu0 0.0
    %225 = vmatpush1.msra.mxu0 %v186
    %226 = vmatprep.subr.mxu0 0.0
    %227 = vmatpush1.msra.mxu0 0.0
    %228 = vmatprep.subr.mxu0 0.0
    %229 = vmatpush1.msra.mxu0 0.0
    %230 = vmatprep.subr.mxu0 0.0
    %231 = vmatpush1.msra.mxu0 0.0
    %232 = vmatprep.subr.mxu0 0.0
    %233 = vmatpush1.msra.mxu0 0.0
    %234 = vmatprep.subr.mxu0 0.0
    %235 = vmatpush1.msra.mxu0 0.0
    %236 = vmatprep.subr.mxu0 0.0
    %237 = vmatpush1.msra.mxu0 0.0
    %238 = vmatprep.subr.mxu0 0.0
    %239 = vmatpush1.msra.mxu0 0.0
    %240 = vmatprep.subr.mxu0 0.0
    %241 = vmatpush1.msra.mxu0 0.0
    %242 = vmatprep.subr.mxu0 0.0
    %243 = vmatpush1.msra.mxu0 0.0
    %244 = vmatprep.subr.mxu0 0.0
    %245 = vmatpush1.msra.mxu0 0.0
    %246 = vmatprep.subr.mxu0 0.0
    %247 = vmatpush1.msra.mxu0 0.0
    %248 = vmatprep.subr.mxu0 0.0
    %249 = vmatpush1.msra.mxu0 0.0
    %250 = vmatprep.subr.mxu0 0.0
    %251 = vmatpush1.msra.mxu0 0.0
    %252 = vmatprep.subr.mxu0 0.0
    %253 = vmatpush1.msra.mxu0 0.0
    %254 = vmatprep.subr.mxu0 0.0
    %255 = vmatpush1.msra.mxu0 0.0
    %256 = vmatprep.subr.mxu0 0.0
    %257 = vmatpush1.msra.mxu0 0.0
    %258 = vmatprep.mubr.f32.mxu0 0.0
    %259 = vmatmul.mubr.f32.gmra.mrb[0].mxu0 %v169
    %v260 = vpop.f32.mrb[0].mxu0
    %v261 = vadd.f32 %v192, %v260
    %v262 = vpop.f32.mrb[0].mxu0
    %263 = vmatprep.mubr.f32.mxu0 0.0
    %264 = vmatmul.mubr.f32.gmra.mrb[0].mxu0 %v170
    %v265 = vpop.f32.mrb[0].mxu0
    %v266 = vadd.f32 %v192, %v265
    %v267 = vpop.f32.mrb[0].mxu0
    %268 = vdwg.mxu0
    %269 = vst [vmem:[#allocation9] sm:$0xff] %v261
    %270 = vst [vmem:[#allocation9 + $0x8] sm:$0xff] %v266
    // Predicated region
    $region38: #{tpu_custom_call.1} parent=1 // pred_check
      _
    $region39: #{tpu_custom_call.1} parent=1 // pred_check_branch
      %272 = sbr.rel (0) target = $region41
    $region40: #{tpu_custom_call.1} parent=1 // pred_region
      %s274 = ssub.s32 256, 256
      %275 = vsyncadd [#allocation5], %s274
      %s276 = sshll.u32 [#allocation9], 4
      %s277 = int_to_ptr.vmem [resolvable:$true] %s276
      %282 = dma.vmem_to_hbm [thread:$0]  %s277, 256, %s5, [#allocation5], 128, 128, 8
    $region41: #{tpu_custom_call.1} parent=1 // pred_fallthru
      _
    // Predicated region
    $region42: #{tpu_custom_call.1} parent=1 // pred_check
      _
    $region43: #{tpu_custom_call.1} parent=1 // pred_check_branch
      %284 = sbr.rel (0) target = $region45
    $region44: #{tpu_custom_call.1} parent=1 // pred_region
      %285 = dma.done [#allocation5], 256
    $region45: #{tpu_custom_call.1} parent=1 // pred_fallthru
      _
    %286 = vsyncpa [#allocation4], 1
    %287 = vsyncpa [#allocation7], 1
    %288 = vsyncpa [#allocation5], 1

</llo_original>
